<compile_context>
chip_gen: v5e
topology: v5e:2x2
jax: 0.10.0
libtpu: 0.0.40
codegen_flags: <defaults>
</compile_context>

<pallas_src>
import jax
import jax.numpy as jnp
from jax import lax
from jax.experimental import pallas as pl
from jax.experimental.pallas import tpu as pltpu


LANE = 128


def _round_up(n, m):
    return ((n + m - 1) // m) * m


def rnn_fc_kernel(
    x_ref,      # (S, I)    f32
    wih0_ref,   # (I, Hp)   layer-0 input weights (pre-transposed, lane-padded)
    b0_ref,     # (1, Hp)   bih0 + bhh0 (folded)
    whh0_ref,   # (Hp, Hp)  layer-0 recurrent weights (pre-transposed)
    wih1_ref,   # (Hp, Hp)  layer-1 input weights (pre-transposed)
    b1_ref,     # (1, Hp)   bih1 + bhh1 (folded)
    whh1_ref,   # (Hp, Hp)  layer-1 recurrent weights (pre-transposed)
    wfc_ref,    # (Hp, Cp)  fc weights (pre-transposed)
    bfc_ref,    # (1, Cp)
    out_ref,    # (S, Cp)
):
    S = x_ref.shape[0]
    Hp = whh0_ref.shape[0]

    # Small, reused every step -> hold as values (vregs).
    whh0 = whh0_ref[...]
    wih1 = wih1_ref[...]
    whh1 = whh1_ref[...]
    b1 = b1_ref[...]

    # Layer-0 input projection for ALL timesteps in one MXU matmul, with both
    # layer-0 biases folded in.  (S, Hp) f32 stays in vregs; no scratch.
    xw0 = (
        jnp.dot(x_ref[...], wih0_ref[...], preferred_element_type=jnp.float32)
        + b0_ref[...]
    )

    zero = jnp.zeros((1, Hp), jnp.float32)
    h0_prev = zero          # h0_{t-1}
    h1_prev = zero          # h1_{t-2}
    h0_hist = []            # h0_t values (consumed one step later by layer 1)
    h1_rows = []            # layer-1 outputs, stacked once at the end

    # Wavefront over the two layers, fully unrolled (S is static and small).
    # Step t computes h0_t (from h0_{t-1}) and h1_{t-1} (from h0_{t-1}, h1_{t-2});
    # the two chains inside a step are independent, so their MXU matmuls and
    # EUP tanh can overlap, roughly halving the serial latency.
    for t in range(S + 1):
        if t < S:
            h0_t = jnp.tanh(
                xw0[t : t + 1, :]
                + jnp.dot(h0_prev, whh0, preferred_element_type=jnp.float32)
            )
        if t > 0:
            h1_t = jnp.tanh(
                jnp.dot(h0_hist[t - 1], wih1, preferred_element_type=jnp.float32)
                + b1
                + jnp.dot(h1_prev, whh1, preferred_element_type=jnp.float32)
            )
            h1_rows.append(h1_t)
            h1_prev = h1_t
        if t < S:
            h0_hist.append(h0_t)
            h0_prev = h0_t

    # One dense (S, Hp) value -> single MXU matmul for the fc head and a single
    # lane-dense (S, Cp) store (no per-step masked vst).
    h1_all = jnp.concatenate(h1_rows, axis=0)
    out_ref[...] = (
        jnp.dot(h1_all, wfc_ref[...], preferred_element_type=jnp.float32)
        + bfc_ref[...]
    )


def rnn_fc_forward(x, params):
    """x: (seq, batch=1, input_size) f32. Returns (seq, num_classes) f32."""
    S, B, I = x.shape
    assert B == 1, "original module is only shape-consistent for batch == 1"
    H = params["whh0"].shape[0]
    C = params["wfc"].shape[0]
    Hp = _round_up(H, LANE)
    Cp = _round_up(C, LANE)

    x2d = x.reshape(S, I).astype(jnp.float32)

    def pad2(w, r, c):
        return jnp.pad(w, ((0, r - w.shape[0]), (0, c - w.shape[1])))

    def pad1(b, n):
        return jnp.pad(b, (0, n - b.shape[0])).reshape(1, n)

    # Pre-transpose + zero-pad weights/biases so every kernel matmul is a
    # row-major (rows, K) @ (K, lanes) with lane-dense (multiple-of-128) output.
    # Zero padding keeps padded lanes exactly 0 through tanh, so results match
    # the unpadded math; the extra columns are sliced off below.
    wih0 = pad2(params["wih0"], Hp, I).T                       # (I,  Hp)
    whh0 = pad2(params["whh0"], Hp, Hp).T                      # (Hp, Hp)
    b0 = pad1(params["bih0"] + params["bhh0"], Hp)             # (1,  Hp)
    wih1 = pad2(params["wih1"], Hp, Hp).T                      # (Hp, Hp)
    whh1 = pad2(params["whh1"], Hp, Hp).T                      # (Hp, Hp)
    b1 = pad1(params["bih1"] + params["bhh1"], Hp)             # (1,  Hp)
    wfc = pad2(params["wfc"], Cp, Hp).T                        # (Hp, Cp)
    bfc = pad1(params["bfc"], Cp)                              # (1,  Cp)

    args = (x2d, wih0, b0, whh0, wih1, b1, whh1, wfc, bfc)

    vmem = pl.BlockSpec(memory_space=pltpu.MemorySpace.VMEM)
    out_padded = pl.pallas_call(
        rnn_fc_kernel,
        out_shape=jax.ShapeDtypeStruct((S, Cp), jnp.float32),
        in_specs=[vmem] * len(args),
        out_specs=vmem,
    )(*args)
    return out_padded[:, :C]


def rnn_fc_reference(x, params):
    """Pure-JAX reference mirroring torch.nn.RNN(num_layers=2) + Linear."""
    S, B, I = x.shape
    H = params["whh0"].shape[0]
    xs = x.reshape(S, I)

    def run_layer(inp, wih, bih, whh, bhh):
        def step(h, x_t):
            h_new = jnp.tanh(x_t @ wih.T + bih + h @ whh.T + bhh)
            return h_new, h_new
        h0 = jnp.zeros((H,), jnp.float32)
        _, outs = lax.scan(step, h0, inp)
        return outs

    o0 = run_layer(xs, params["wih0"], params["bih0"], params["whh0"], params["bhh0"])
    o1 = run_layer(o0, params["wih1"], params["bih1"], params["whh1"], params["bhh1"])
    return o1 @ params["wfc"].T + params["bfc"]


def init_params(key, input_size, hidden_size, num_classes):
    """Deterministic init matching PyTorch shapes (uniform +-1/sqrt(hidden))."""
    bound = 1.0 / (hidden_size ** 0.5)
    names_shapes = [
        ("wih0", (hidden_size, input_size)),
        ("whh0", (hidden_size, hidden_size)),
        ("bih0", (hidden_size,)),
        ("bhh0", (hidden_size,)),
        ("wih1", (hidden_size, hidden_size)),
        ("whh1", (hidden_size, hidden_size)),
        ("bih1", (hidden_size,)),
        ("bhh1", (hidden_size,)),
        ("wfc",  (num_classes, hidden_size)),
        ("bfc",  (num_classes,)),
    ]
    keys = jax.random.split(key, len(names_shapes))
    return {
        name: jax.random.uniform(k, shape, jnp.float32, -bound, bound)
        for (name, shape), k in zip(names_shapes, keys)
    }


if __name__ == "__main__":
    # Small shapes consistent with the module's forward (batch_first=False, batch=1).
    seq, batch, input_size = 8, 1, 64
    hidden_size, num_layers, num_classes = 32, 2, 5

    key = jax.random.PRNGKey(0)
    kx, kp = jax.random.split(key)
    x = jax.random.normal(kx, (seq, batch, input_size), jnp.float32)
    params = init_params(kp, input_size, hidden_size, num_classes)

    out = rnn_fc_forward(x, params)
    out = jax.block_until_ready(out)

    ref = rnn_fc_reference(x, params)
    assert out.shape == (seq, num_classes)
    assert jnp.allclose(out, ref, atol=1e-5, rtol=1e-5), "mismatch vs reference"

    print("KERNEL_OK")
</pallas_src>

<mosaic_0001>
module attributes {stable_mosaic.version = 11 : i64} {
  func.func @rnn_fc_kernel(%arg0: memref<8x64xf32, #tpu.memory_space<vmem>>, %arg1: memref<64x128xf32, #tpu.memory_space<vmem>>, %arg2: memref<1x128xf32, #tpu.memory_space<vmem>>, %arg3: memref<128x128xf32, #tpu.memory_space<vmem>>, %arg4: memref<128x128xf32, #tpu.memory_space<vmem>>, %arg5: memref<1x128xf32, #tpu.memory_space<vmem>>, %arg6: memref<128x128xf32, #tpu.memory_space<vmem>>, %arg7: memref<128x128xf32, #tpu.memory_space<vmem>>, %arg8: memref<1x128xf32, #tpu.memory_space<vmem>>, %arg9: memref<8x128xf32, #tpu.memory_space<vmem>>) attributes {dimension_semantics = [], scalar_prefetch = 0 : i64, scratch_operands = 0 : i64, tpu.core_type = #tpu.core_type<tc>} {
    %c0 = arith.constant 0 : index
    %c0_0 = arith.constant 0 : index
    %0 = vector.load %arg3[%c0, %c0_0] : memref<128x128xf32, #tpu.memory_space<vmem>>, vector<128x128xf32>
    %c0_1 = arith.constant 0 : index
    %c0_2 = arith.constant 0 : index
    %1 = vector.load %arg4[%c0_1, %c0_2] : memref<128x128xf32, #tpu.memory_space<vmem>>, vector<128x128xf32>
    %c0_3 = arith.constant 0 : index
    %c0_4 = arith.constant 0 : index
    %2 = vector.load %arg6[%c0_3, %c0_4] : memref<128x128xf32, #tpu.memory_space<vmem>>, vector<128x128xf32>
    %c0_5 = arith.constant 0 : index
    %c0_6 = arith.constant 0 : index
    %3 = vector.load %arg5[%c0_5, %c0_6] : memref<1x128xf32, #tpu.memory_space<vmem>>, vector<1x128xf32>
    %c0_7 = arith.constant 0 : index
    %c0_8 = arith.constant 0 : index
    %4 = vector.load %arg0[%c0_7, %c0_8] : memref<8x64xf32, #tpu.memory_space<vmem>>, vector<8x64xf32>
    %c0_9 = arith.constant 0 : index
    %c0_10 = arith.constant 0 : index
    %5 = vector.load %arg1[%c0_9, %c0_10] : memref<64x128xf32, #tpu.memory_space<vmem>>, vector<64x128xf32>
    %cst = arith.constant dense<0.000000e+00> : vector<8x128xf32>
    %6 = tpu.matmul %4, %5, %cst {dimension_numbers = #tpu.dot_dimension_numbers<[1], [0], [0], [1], [0, 0, 1, 1], [], []>} : vector<8x64xf32>, vector<64x128xf32>, vector<8x128xf32> -> vector<8x128xf32>
    %c0_11 = arith.constant 0 : index
    %c0_12 = arith.constant 0 : index
    %7 = vector.load %arg2[%c0_11, %c0_12] : memref<1x128xf32, #tpu.memory_space<vmem>>, vector<1x128xf32>
    %8 = vector.broadcast %7 : vector<1x128xf32> to vector<8x128xf32>
    %9 = arith.addf %6, %8 : vector<8x128xf32>
    %cst_13 = arith.constant 0.000000e+00 : f32
    %10 = vector.broadcast %cst_13 : f32 to vector<1x128xf32>
    %11 = vector.extract_strided_slice %9 {offsets = [0, 0], sizes = [1, 128], strides = [1, 1]} : vector<8x128xf32> to vector<1x128xf32>
    %cst_14 = arith.constant dense<0.000000e+00> : vector<1x128xf32>
    %12 = tpu.matmul %10, %0, %cst_14 {dimension_numbers = #tpu.dot_dimension_numbers<[1], [0], [0], [1], [0, 0, 1, 1], [], []>} : vector<1x128xf32>, vector<128x128xf32>, vector<1x128xf32> -> vector<1x128xf32>
    %13 = arith.addf %11, %12 : vector<1x128xf32>
    %14 = math.tanh %13 : vector<1x128xf32>
    %15 = vector.extract_strided_slice %9 {offsets = [1, 0], sizes = [1, 128], strides = [1, 1]} : vector<8x128xf32> to vector<1x128xf32>
    %cst_15 = arith.constant dense<0.000000e+00> : vector<1x128xf32>
    %16 = tpu.matmul %14, %0, %cst_15 {dimension_numbers = #tpu.dot_dimension_numbers<[1], [0], [0], [1], [0, 0, 1, 1], [], []>} : vector<1x128xf32>, vector<128x128xf32>, vector<1x128xf32> -> vector<1x128xf32>
    %17 = arith.addf %15, %16 : vector<1x128xf32>
    %18 = math.tanh %17 : vector<1x128xf32>
    %cst_16 = arith.constant dense<0.000000e+00> : vector<1x128xf32>
    %19 = tpu.matmul %14, %1, %cst_16 {dimension_numbers = #tpu.dot_dimension_numbers<[1], [0], [0], [1], [0, 0, 1, 1], [], []>} : vector<1x128xf32>, vector<128x128xf32>, vector<1x128xf32> -> vector<1x128xf32>
    %20 = arith.addf %19, %3 : vector<1x128xf32>
    %cst_17 = arith.constant dense<0.000000e+00> : vector<1x128xf32>
    %21 = tpu.matmul %10, %2, %cst_17 {dimension_numbers = #tpu.dot_dimension_numbers<[1], [0], [0], [1], [0, 0, 1, 1], [], []>} : vector<1x128xf32>, vector<128x128xf32>, vector<1x128xf32> -> vector<1x128xf32>
    %22 = arith.addf %20, %21 : vector<1x128xf32>
    %23 = math.tanh %22 : vector<1x128xf32>
    %24 = vector.extract_strided_slice %9 {offsets = [2, 0], sizes = [1, 128], strides = [1, 1]} : vector<8x128xf32> to vector<1x128xf32>
    %cst_18 = arith.constant dense<0.000000e+00> : vector<1x128xf32>
    %25 = tpu.matmul %18, %0, %cst_18 {dimension_numbers = #tpu.dot_dimension_numbers<[1], [0], [0], [1], [0, 0, 1, 1], [], []>} : vector<1x128xf32>, vector<128x128xf32>, vector<1x128xf32> -> vector<1x128xf32>
    %26 = arith.addf %24, %25 : vector<1x128xf32>
    %27 = math.tanh %26 : vector<1x128xf32>
    %cst_19 = arith.constant dense<0.000000e+00> : vector<1x128xf32>
    %28 = tpu.matmul %18, %1, %cst_19 {dimension_numbers = #tpu.dot_dimension_numbers<[1], [0], [0], [1], [0, 0, 1, 1], [], []>} : vector<1x128xf32>, vector<128x128xf32>, vector<1x128xf32> -> vector<1x128xf32>
    %29 = arith.addf %28, %3 : vector<1x128xf32>
    %cst_20 = arith.constant dense<0.000000e+00> : vector<1x128xf32>
    %30 = tpu.matmul %23, %2, %cst_20 {dimension_numbers = #tpu.dot_dimension_numbers<[1], [0], [0], [1], [0, 0, 1, 1], [], []>} : vector<1x128xf32>, vector<128x128xf32>, vector<1x128xf32> -> vector<1x128xf32>
    %31 = arith.addf %29, %30 : vector<1x128xf32>
    %32 = math.tanh %31 : vector<1x128xf32>
    %33 = vector.extract_strided_slice %9 {offsets = [3, 0], sizes = [1, 128], strides = [1, 1]} : vector<8x128xf32> to vector<1x128xf32>
    %cst_21 = arith.constant dense<0.000000e+00> : vector<1x128xf32>
    %34 = tpu.matmul %27, %0, %cst_21 {dimension_numbers = #tpu.dot_dimension_numbers<[1], [0], [0], [1], [0, 0, 1, 1], [], []>} : vector<1x128xf32>, vector<128x128xf32>, vector<1x128xf32> -> vector<1x128xf32>
    %35 = arith.addf %33, %34 : vector<1x128xf32>
    %36 = math.tanh %35 : vector<1x128xf32>
    %cst_22 = arith.constant dense<0.000000e+00> : vector<1x128xf32>
    %37 = tpu.matmul %27, %1, %cst_22 {dimension_numbers = #tpu.dot_dimension_numbers<[1], [0], [0], [1], [0, 0, 1, 1], [], []>} : vector<1x128xf32>, vector<128x128xf32>, vector<1x128xf32> -> vector<1x128xf32>
    %38 = arith.addf %37, %3 : vector<1x128xf32>
    %cst_23 = arith.constant dense<0.000000e+00> : vector<1x128xf32>
    %39 = tpu.matmul %32, %2, %cst_23 {dimension_numbers = #tpu.dot_dimension_numbers<[1], [0], [0], [1], [0, 0, 1, 1], [], []>} : vector<1x128xf32>, vector<128x128xf32>, vector<1x128xf32> -> vector<1x128xf32>
    %40 = arith.addf %38, %39 : vector<1x128xf32>
    %41 = math.tanh %40 : vector<1x128xf32>
    %42 = vector.extract_strided_slice %9 {offsets = [4, 0], sizes = [1, 128], strides = [1, 1]} : vector<8x128xf32> to vector<1x128xf32>
    %cst_24 = arith.constant dense<0.000000e+00> : vector<1x128xf32>
    %43 = tpu.matmul %36, %0, %cst_24 {dimension_numbers = #tpu.dot_dimension_numbers<[1], [0], [0], [1], [0, 0, 1, 1], [], []>} : vector<1x128xf32>, vector<128x128xf32>, vector<1x128xf32> -> vector<1x128xf32>
    %44 = arith.addf %42, %43 : vector<1x128xf32>
    %45 = math.tanh %44 : vector<1x128xf32>
    %cst_25 = arith.constant dense<0.000000e+00> : vector<1x128xf32>
    %46 = tpu.matmul %36, %1, %cst_25 {dimension_numbers = #tpu.dot_dimension_numbers<[1], [0], [0], [1], [0, 0, 1, 1], [], []>} : vector<1x128xf32>, vector<128x128xf32>, vector<1x128xf32> -> vector<1x128xf32>
    %47 = arith.addf %46, %3 : vector<1x128xf32>
    %cst_26 = arith.constant dense<0.000000e+00> : vector<1x128xf32>
    %48 = tpu.matmul %41, %2, %cst_26 {dimension_numbers = #tpu.dot_dimension_numbers<[1], [0], [0], [1], [0, 0, 1, 1], [], []>} : vector<1x128xf32>, vector<128x128xf32>, vector<1x128xf32> -> vector<1x128xf32>
    %49 = arith.addf %47, %48 : vector<1x128xf32>
    %50 = math.tanh %49 : vector<1x128xf32>
    %51 = vector.extract_strided_slice %9 {offsets = [5, 0], sizes = [1, 128], strides = [1, 1]} : vector<8x128xf32> to vector<1x128xf32>
    %cst_27 = arith.constant dense<0.000000e+00> : vector<1x128xf32>
    %52 = tpu.matmul %45, %0, %cst_27 {dimension_numbers = #tpu.dot_dimension_numbers<[1], [0], [0], [1], [0, 0, 1, 1], [], []>} : vector<1x128xf32>, vector<128x128xf32>, vector<1x128xf32> -> vector<1x128xf32>
    %53 = arith.addf %51, %52 : vector<1x128xf32>
    %54 = math.tanh %53 : vector<1x128xf32>
    %cst_28 = arith.constant dense<0.000000e+00> : vector<1x128xf32>
    %55 = tpu.matmul %45, %1, %cst_28 {dimension_numbers = #tpu.dot_dimension_numbers<[1], [0], [0], [1], [0, 0, 1, 1], [], []>} : vector<1x128xf32>, vector<128x128xf32>, vector<1x128xf32> -> vector<1x128xf32>
    %56 = arith.addf %55, %3 : vector<1x128xf32>
    %cst_29 = arith.constant dense<0.000000e+00> : vector<1x128xf32>
    %57 = tpu.matmul %50, %2, %cst_29 {dimension_numbers = #tpu.dot_dimension_numbers<[1], [0], [0], [1], [0, 0, 1, 1], [], []>} : vector<1x128xf32>, vector<128x128xf32>, vector<1x128xf32> -> vector<1x128xf32>
    %58 = arith.addf %56, %57 : vector<1x128xf32>
    %59 = math.tanh %58 : vector<1x128xf32>
    %60 = vector.extract_strided_slice %9 {offsets = [6, 0], sizes = [1, 128], strides = [1, 1]} : vector<8x128xf32> to vector<1x128xf32>
    %cst_30 = arith.constant dense<0.000000e+00> : vector<1x128xf32>
    %61 = tpu.matmul %54, %0, %cst_30 {dimension_numbers = #tpu.dot_dimension_numbers<[1], [0], [0], [1], [0, 0, 1, 1], [], []>} : vector<1x128xf32>, vector<128x128xf32>, vector<1x128xf32> -> vector<1x128xf32>
    %62 = arith.addf %60, %61 : vector<1x128xf32>
    %63 = math.tanh %62 : vector<1x128xf32>
    %cst_31 = arith.constant dense<0.000000e+00> : vector<1x128xf32>
    %64 = tpu.matmul %54, %1, %cst_31 {dimension_numbers = #tpu.dot_dimension_numbers<[1], [0], [0], [1], [0, 0, 1, 1], [], []>} : vector<1x128xf32>, vector<128x128xf32>, vector<1x128xf32> -> vector<1x128xf32>
    %65 = arith.addf %64, %3 : vector<1x128xf32>
    %cst_32 = arith.constant dense<0.000000e+00> : vector<1x128xf32>
    %66 = tpu.matmul %59, %2, %cst_32 {dimension_numbers = #tpu.dot_dimension_numbers<[1], [0], [0], [1], [0, 0, 1, 1], [], []>} : vector<1x128xf32>, vector<128x128xf32>, vector<1x128xf32> -> vector<1x128xf32>
    %67 = arith.addf %65, %66 : vector<1x128xf32>
    %68 = math.tanh %67 : vector<1x128xf32>
    %69 = vector.extract_strided_slice %9 {offsets = [7, 0], sizes = [1, 128], strides = [1, 1]} : vector<8x128xf32> to vector<1x128xf32>
    %cst_33 = arith.constant dense<0.000000e+00> : vector<1x128xf32>
    %70 = tpu.matmul %63, %0, %cst_33 {dimension_numbers = #tpu.dot_dimension_numbers<[1], [0], [0], [1], [0, 0, 1, 1], [], []>} : vector<1x128xf32>, vector<128x128xf32>, vector<1x128xf32> -> vector<1x128xf32>
    %71 = arith.addf %69, %70 : vector<1x128xf32>
    %72 = math.tanh %71 : vector<1x128xf32>
    %cst_34 = arith.constant dense<0.000000e+00> : vector<1x128xf32>
    %73 = tpu.matmul %63, %1, %cst_34 {dimension_numbers = #tpu.dot_dimension_numbers<[1], [0], [0], [1], [0, 0, 1, 1], [], []>} : vector<1x128xf32>, vector<128x128xf32>, vector<1x128xf32> -> vector<1x128xf32>
    %74 = arith.addf %73, %3 : vector<1x128xf32>
    %cst_35 = arith.constant dense<0.000000e+00> : vector<1x128xf32>
    %75 = tpu.matmul %68, %2, %cst_35 {dimension_numbers = #tpu.dot_dimension_numbers<[1], [0], [0], [1], [0, 0, 1, 1], [], []>} : vector<1x128xf32>, vector<128x128xf32>, vector<1x128xf32> -> vector<1x128xf32>
    %76 = arith.addf %74, %75 : vector<1x128xf32>
    %77 = math.tanh %76 : vector<1x128xf32>
    %cst_36 = arith.constant dense<0.000000e+00> : vector<1x128xf32>
    %78 = tpu.matmul %72, %1, %cst_36 {dimension_numbers = #tpu.dot_dimension_numbers<[1], [0], [0], [1], [0, 0, 1, 1], [], []>} : vector<1x128xf32>, vector<128x128xf32>, vector<1x128xf32> -> vector<1x128xf32>
    %79 = arith.addf %78, %3 : vector<1x128xf32>
    %cst_37 = arith.constant dense<0.000000e+00> : vector<1x128xf32>
    %80 = tpu.matmul %77, %2, %cst_37 {dimension_numbers = #tpu.dot_dimension_numbers<[1], [0], [0], [1], [0, 0, 1, 1], [], []>} : vector<1x128xf32>, vector<128x128xf32>, vector<1x128xf32> -> vector<1x128xf32>
    %81 = arith.addf %79, %80 : vector<1x128xf32>
    %82 = math.tanh %81 : vector<1x128xf32>
    %83 = tpu.concatenate %23, %32, %41, %50, %59, %68, %77, %82 in 0 : vector<1x128xf32>, vector<1x128xf32>, vector<1x128xf32>, vector<1x128xf32>, vector<1x128xf32>, vector<1x128xf32>, vector<1x128xf32>, vector<1x128xf32> -> vector<8x128xf32>
    %c0_38 = arith.constant 0 : index
    %c0_39 = arith.constant 0 : index
    %84 = vector.load %arg7[%c0_38, %c0_39] : memref<128x128xf32, #tpu.memory_space<vmem>>, vector<128x128xf32>
    %cst_40 = arith.constant dense<0.000000e+00> : vector<8x128xf32>
    %85 = tpu.matmul %83, %84, %cst_40 {dimension_numbers = #tpu.dot_dimension_numbers<[1], [0], [0], [1], [0, 0, 1, 1], [], []>} : vector<8x128xf32>, vector<128x128xf32>, vector<8x128xf32> -> vector<8x128xf32>
    %c0_41 = arith.constant 0 : index
    %c0_42 = arith.constant 0 : index
    %86 = vector.load %arg8[%c0_41, %c0_42] : memref<1x128xf32, #tpu.memory_space<vmem>>, vector<1x128xf32>
    %87 = vector.broadcast %86 : vector<1x128xf32> to vector<8x128xf32>
    %88 = arith.addf %85, %87 : vector<8x128xf32>
    %c0_43 = arith.constant 0 : index
    %c0_44 = arith.constant 0 : index
    %89 = vector.load %arg9[%c0_43, %c0_44] : memref<8x128xf32, #tpu.memory_space<vmem>>, vector<8x128xf32>
    tpu.vector_store %arg9[%c0_43, %c0_44], %88 {strides = array<i32>} : memref<8x128xf32, #tpu.memory_space<vmem>>, vector<8x128xf32>,
    return
  }
}

</mosaic_0001>

<llo_original>
// kernel: tpu_custom_call.1
$region0: #{tpu_custom_call.1}
  #allocation0 [shape = 'u32[]', space=smem, size = 0x4, offset = 0x4, fixed_abs, tag = 'smem constant byte address 0x4 - core index']
  #allocation1 [shape = 'u32[72,128]{1,0:T(1,128)}', space=vmem, size = 0x9000, scoped, tag = 'internal scratch']
  %s0 = inlined_call_operand.hbm [shape: f32[8,64], index: 0, kind: input, shape index: {}]
  %s1 = inlined_call_operand.hbm [shape: f32[64,128], index: 1, kind: input, shape index: {}]
  %s2 = inlined_call_operand.vmem [shape: f32[1,128], index: 2, kind: input, shape index: {}]
  %s3 = inlined_call_operand.hbm [shape: f32[128,128], index: 3, kind: input, shape index: {}]
  %s4 = inlined_call_operand.hbm [shape: f32[128,128], index: 4, kind: input, shape index: {}]
  %s5 = inlined_call_operand.vmem [shape: f32[1,128], index: 5, kind: input, shape index: {}]
  %s6 = inlined_call_operand.hbm [shape: f32[128,128], index: 6, kind: input, shape index: {}]
  %s7 = inlined_call_operand.hbm [shape: f32[128,128], index: 7, kind: input, shape index: {}]
  %s8 = inlined_call_operand.vmem [shape: f32[1,128], index: 8, kind: input, shape index: {}]
  %s9 = inlined_call_operand.hbm [shape: f32[8,128], index: 9, kind: output, shape index: {}]
  %s10 = sld [smem:[#allocation0]]
  $region70: #{tpu_custom_call.1} parent=0
    _
  %s12 = ssub.s32 1, %s10
  %s13 = scalar_select 0, %s12, %s10
  $region1: #{tpu_custom_call.1} parent=0
    #allocation2 [shape = 'u8[4096]{0}', space=vmem, size = 0x1000, scoped, tag = 'input window, operand 0, single buffered']
    #allocation3 [shape = 's32[1]{0}', space=sflag, size = 0x4, scoped, tag = 'scoped memory for tpu_custom_call.1']
    #allocation4 [shape = 's32[1]{0}', space=sflag, size = 0x4, scoped, tag = 'scoped memory for tpu_custom_call.1']
    #allocation5 [shape = 'u8[32768]{0}', space=vmem, size = 0x8000, scoped, tag = 'input window, operand 1, single buffered']
    #allocation6 [shape = 's32[1]{0}', space=sflag, size = 0x4, scoped, tag = 'scoped memory for tpu_custom_call.1']
    #allocation7 [shape = 'u8[65536]{0}', space=vmem, size = 0x10000, scoped, tag = 'input window, operand 3, single buffered']
    #allocation8 [shape = 'u8[65536]{0}', space=vmem, size = 0x10000, scoped, tag = 'input window, operand 4, single buffered']
    #allocation9 [shape = 's32[1]{0}', space=sflag, size = 0x4, scoped, tag = 'scoped memory for tpu_custom_call.1']
    #allocation10 [shape = 'u8[65536]{0}', space=vmem, size = 0x10000, scoped, tag = 'input window, operand 6, single buffered']
    #allocation11 [shape = 'u8[65536]{0}', space=vmem, size = 0x10000, scoped, tag = 'input window, operand 7, single buffered']
    #allocation12 [shape = 's32[1]{0}', space=sflag, size = 0x4, scoped, tag = 'scoped memory for tpu_custom_call.1']
    #allocation13 [shape = 'u8[4096]{0}', space=vmem, size = 0x1000, scoped, tag = 'output window, operand 0, single buffered']
    %14 = vsyncpa [#allocation3], 0
    %15 = vsyncpa [#allocation6], 0
    %16 = vsyncpa [#allocation9], 0
    %17 = vsyncpa [#allocation12], 0
    %18 = vsyncpa [#allocation4], 0
    // Predicated region
    $region2: #{tpu_custom_call.1} parent=1 // pred_check
      _
    $region3: #{tpu_custom_call.1} parent=1 // pred_check_branch
      %20 = sbr.rel (0) target = $region5
    $region4: #{tpu_custom_call.1} parent=1 // pred_region
      %22 = vsyncadd [#allocation3], 0
      %s24 = sshll.u32 %s0, 4
      %s25 = int_to_ptr.hbm [resolvable:$true] %s24
      %s26 = sshll.u32 [#allocation2], 4
      %s27 = int_to_ptr.vmem [resolvable:$true] %s26
      %29 = dma.hbm_to_vmem [thread:$0]  %s25, 128, %s27, [#allocation3]
    $region5: #{tpu_custom_call.1} parent=1 // pred_fallthru
      _
    // Predicated region
    $region6: #{tpu_custom_call.1} parent=1 // pred_check
      _
    $region7: #{tpu_custom_call.1} parent=1 // pred_check_branch
      %31 = sbr.rel (0) target = $region9
    $region8: #{tpu_custom_call.1} parent=1 // pred_region
      %33 = vsyncadd [#allocation6], 0
      %s34 = sshll.u32 %s1, 4
      %s35 = int_to_ptr.hbm [resolvable:$true] %s34
      %s36 = sshll.u32 [#allocation5], 4
      %s37 = int_to_ptr.vmem [resolvable:$true] %s36
      %42 = dma.hbm_to_vmem [thread:$0]  %s35, 1024, %s37, [#allocation6], 128, 128, 8
    $region9: #{tpu_custom_call.1} parent=1 // pred_fallthru
      _
    // Predicated region
    $region10: #{tpu_custom_call.1} parent=1 // pred_check
      _
    $region11: #{tpu_custom_call.1} parent=1 // pred_check_branch
      %44 = sbr.rel (0) target = $region13
    $region12: #{tpu_custom_call.1} parent=1 // pred_region
      _
    $region13: #{tpu_custom_call.1} parent=1 // pred_fallthru
      _
    // Predicated region
    $region14: #{tpu_custom_call.1} parent=1 // pred_check
      _
    $region15: #{tpu_custom_call.1} parent=1 // pred_check_branch
      %46 = sbr.rel (0) target = $region17
    $region16: #{tpu_custom_call.1} parent=1 // pred_region
      %48 = vsyncadd [#allocation6], 0
      %s49 = sshll.u32 %s3, 4
      %s50 = int_to_ptr.hbm [resolvable:$true] %s49
      %s51 = sshll.u32 [#allocation7], 4
      %s52 = int_to_ptr.vmem [resolvable:$true] %s51
      %57 = dma.hbm_to_vmem [thread:$0]  %s50, 2048, %s52, [#allocation6], 128, 128, 8
    $region17: #{tpu_custom_call.1} parent=1 // pred_fallthru
      _
    // Predicated region
    $region18: #{tpu_custom_call.1} parent=1 // pred_check
      _
    $region19: #{tpu_custom_call.1} parent=1 // pred_check_branch
      %59 = sbr.rel (0) target = $region21
    $region20: #{tpu_custom_call.1} parent=1 // pred_region
      %61 = vsyncadd [#allocation9], 0
      %s62 = sshll.u32 %s4, 4
      %s63 = int_to_ptr.hbm [resolvable:$true] %s62
      %s64 = sshll.u32 [#allocation8], 4
      %s65 = int_to_ptr.vmem [resolvable:$true] %s64
      %70 = dma.hbm_to_vmem [thread:$0]  %s63, 2048, %s65, [#allocation9], 128, 128, 8
    $region21: #{tpu_custom_call.1} parent=1 // pred_fallthru
      _
    // Predicated region
    $region22: #{tpu_custom_call.1} parent=1 // pred_check
      _
    $region23: #{tpu_custom_call.1} parent=1 // pred_check_branch
      %72 = sbr.rel (0) target = $region25
    $region24: #{tpu_custom_call.1} parent=1 // pred_region
      _
    $region25: #{tpu_custom_call.1} parent=1 // pred_fallthru
      _
    // Predicated region
    $region26: #{tpu_custom_call.1} parent=1 // pred_check
      _
    $region27: #{tpu_custom_call.1} parent=1 // pred_check_branch
      %74 = sbr.rel (0) target = $region29
    $region28: #{tpu_custom_call.1} parent=1 // pred_region
      %76 = vsyncadd [#allocation9], 0
      %s77 = sshll.u32 %s6, 4
      %s78 = int_to_ptr.hbm [resolvable:$true] %s77
      %s79 = sshll.u32 [#allocation10], 4
      %s80 = int_to_ptr.vmem [resolvable:$true] %s79
      %85 = dma.hbm_to_vmem [thread:$0]  %s78, 2048, %s80, [#allocation9], 128, 128, 8
    $region29: #{tpu_custom_call.1} parent=1 // pred_fallthru
      _
    // Predicated region
    $region30: #{tpu_custom_call.1} parent=1 // pred_check
      _
    $region31: #{tpu_custom_call.1} parent=1 // pred_check_branch
      %87 = sbr.rel (0) target = $region33
    $region32: #{tpu_custom_call.1} parent=1 // pred_region
      %89 = vsyncadd [#allocation12], 0
      %s90 = sshll.u32 %s7, 4
      %s91 = int_to_ptr.hbm [resolvable:$true] %s90
      %s92 = sshll.u32 [#allocation11], 4
      %s93 = int_to_ptr.vmem [resolvable:$true] %s92
      %98 = dma.hbm_to_vmem [thread:$0]  %s91, 2048, %s93, [#allocation12], 128, 128, 8
    $region33: #{tpu_custom_call.1} parent=1 // pred_fallthru
      _
    // Predicated region
    $region34: #{tpu_custom_call.1} parent=1 // pred_check
      _
    $region35: #{tpu_custom_call.1} parent=1 // pred_check_branch
      %100 = sbr.rel (0) target = $region37
    $region36: #{tpu_custom_call.1} parent=1 // pred_region
      _
    $region37: #{tpu_custom_call.1} parent=1 // pred_fallthru
      _
    // Predicated region
    $region38: #{tpu_custom_call.1} parent=1 // pred_check
      _
    $region39: #{tpu_custom_call.1} parent=1 // pred_check_branch
      %102 = sbr.rel (0) target = $region41
    $region40: #{tpu_custom_call.1} parent=1 // pred_region
      %104 = dma.done [#allocation3], 128
    $region41: #{tpu_custom_call.1} parent=1 // pred_fallthru
      _
    // Predicated region
    $region42: #{tpu_custom_call.1} parent=1 // pred_check
      _
    $region43: #{tpu_custom_call.1} parent=1 // pred_check_branch
      %106 = sbr.rel (0) target = $region45
    $region44: #{tpu_custom_call.1} parent=1 // pred_region
      %108 = dma.done [#allocation6], 1024
    $region45: #{tpu_custom_call.1} parent=1 // pred_fallthru
      _
    // Predicated region
    $region46: #{tpu_custom_call.1} parent=1 // pred_check
      _
    $region47: #{tpu_custom_call.1} parent=1 // pred_check_branch
      %110 = sbr.rel (0) target = $region49
    $region48: #{tpu_custom_call.1} parent=1 // pred_region
      %112 = dma.done [#allocation6], 2048
    $region49: #{tpu_custom_call.1} parent=1 // pred_fallthru
      _
    // Predicated region
    $region50: #{tpu_custom_call.1} parent=1 // pred_check
      _
    $region51: #{tpu_custom_call.1} parent=1 // pred_check_branch
      %114 = sbr.rel (0) target = $region53
    $region52: #{tpu_custom_call.1} parent=1 // pred_region
      %116 = dma.done [#allocation9], 2048
    $region53: #{tpu_custom_call.1} parent=1 // pred_fallthru
      _
    // Predicated region
    $region54: #{tpu_custom_call.1} parent=1 // pred_check
      _
    $region55: #{tpu_custom_call.1} parent=1 // pred_check_branch
      %118 = sbr.rel (0) target = $region57
    $region56: #{tpu_custom_call.1} parent=1 // pred_region
      %120 = dma.done [#allocation9], 2048
    $region57: #{tpu_custom_call.1} parent=1 // pred_fallthru
      _
    // Predicated region
    $region58: #{tpu_custom_call.1} parent=1 // pred_check
      _
    $region59: #{tpu_custom_call.1} parent=1 // pred_check_branch
      %122 = sbr.rel (0) target = $region61
    $region60: #{tpu_custom_call.1} parent=1 // pred_region
      %124 = dma.done [#allocation12], 2048
    $region61: #{tpu_custom_call.1} parent=1 // pred_fallthru
      _
    %v125 = vld [vmem:[#allocation7] sm:$0xff]
    %v126 = vld [vmem:[#allocation7 + $0x8] sm:$0xff]
    %v127 = vld [vmem:[#allocation7 + $0x10] sm:$0xff]
    %v128 = vld [vmem:[#allocation7 + $0x18] sm:$0xff]
    %v129 = vld [vmem:[#allocation7 + $0x20] sm:$0xff]
    %v130 = vld [vmem:[#allocation7 + $0x28] sm:$0xff]
    %v131 = vld [vmem:[#allocation7 + $0x30] sm:$0xff]
    %v132 = vld [vmem:[#allocation7 + $0x38] sm:$0xff]
    %v133 = vld [vmem:[#allocation7 + $0x40] sm:$0xff]
    %v134 = vld [vmem:[#allocation7 + $0x48] sm:$0xff]
    %v135 = vld [vmem:[#allocation7 + $0x50] sm:$0xff]
    %v136 = vld [vmem:[#allocation7 + $0x58] sm:$0xff]
    %v137 = vld [vmem:[#allocation7 + $0x60] sm:$0xff]
    %v138 = vld [vmem:[#allocation7 + $0x68] sm:$0xff]
    %v139 = vld [vmem:[#allocation7 + $0x70] sm:$0xff]
    %v140 = vld [vmem:[#allocation7 + $0x78] sm:$0xff]
    %v141 = vld [vmem:[#allocation8] sm:$0xff]
    %v142 = vld [vmem:[#allocation8 + $0x8] sm:$0xff]
    %v143 = vld [vmem:[#allocation8 + $0x10] sm:$0xff]
    %v144 = vld [vmem:[#allocation8 + $0x18] sm:$0xff]
    %v145 = vld [vmem:[#allocation8 + $0x20] sm:$0xff]
    %v146 = vld [vmem:[#allocation8 + $0x28] sm:$0xff]
    %v147 = vld [vmem:[#allocation8 + $0x30] sm:$0xff]
    %v148 = vld [vmem:[#allocation8 + $0x38] sm:$0xff]
    %v149 = vld [vmem:[#allocation8 + $0x40] sm:$0xff]
    %v150 = vld [vmem:[#allocation8 + $0x48] sm:$0xff]
    %v151 = vld [vmem:[#allocation8 + $0x50] sm:$0xff]
    %v152 = vld [vmem:[#allocation8 + $0x58] sm:$0xff]
    %v153 = vld [vmem:[#allocation8 + $0x60] sm:$0xff]
    %v154 = vld [vmem:[#allocation8 + $0x68] sm:$0xff]
    %v155 = vld [vmem:[#allocation8 + $0x70] sm:$0xff]
    %v156 = vld [vmem:[#allocation8 + $0x78] sm:$0xff]
    %v157 = vld [vmem:[#allocation10] sm:$0xff]
    %v158 = vld [vmem:[#allocation10 + $0x8] sm:$0xff]
    %v159 = vld [vmem:[#allocation10 + $0x10] sm:$0xff]
    %v160 = vld [vmem:[#allocation10 + $0x18] sm:$0xff]
    %v161 = vld [vmem:[#allocation10 + $0x20] sm:$0xff]
    %v162 = vld [vmem:[#allocation10 + $0x28] sm:$0xff]
    %v163 = vld [vmem:[#allocation10 + $0x30] sm:$0xff]
    %v164 = vld [vmem:[#allocation10 + $0x38] sm:$0xff]
    %v165 = vld [vmem:[#allocation10 + $0x40] sm:$0xff]
    %v166 = vld [vmem:[#allocation10 + $0x48] sm:$0xff]
    %v167 = vld [vmem:[#allocation10 + $0x50] sm:$0xff]
    %v168 = vld [vmem:[#allocation10 + $0x58] sm:$0xff]
    %v169 = vld [vmem:[#allocation10 + $0x60] sm:$0xff]
    %v170 = vld [vmem:[#allocation10 + $0x68] sm:$0xff]
    %v171 = vld [vmem:[#allocation10 + $0x70] sm:$0xff]
    %v172 = vld [vmem:[#allocation10 + $0x78] sm:$0xff]
    %v173 = vld [vmem:[%s5] sm:$0x1]
    %v174 = vld [vmem:[#allocation2] sm:$0xff]
    %v175 = vld [vmem:[#allocation5] sm:$0xff]
    %v176 = vld [vmem:[#allocation5 + $0x8] sm:$0xff]
    %v177 = vld [vmem:[#allocation5 + $0x10] sm:$0xff]
    %v178 = vld [vmem:[#allocation5 + $0x18] sm:$0xff]
    %v179 = vld [vmem:[#allocation5 + $0x20] sm:$0xff]
    %v180 = vld [vmem:[#allocation5 + $0x28] sm:$0xff]
    %v181 = vld [vmem:[#allocation5 + $0x30] sm:$0xff]
    %v182 = vld [vmem:[#allocation5 + $0x38] sm:$0xff]
    %v183 = vld [vmem:[%s2] sm:$0x1]
    %v185 = vperm.slane %v183, 0
    %vm187 = vcmask 523264
    %v189 = vsel %vm187, %v174, 0
    %191 = vmatpush.msra.mxu0 0.0
    %192 = vmatpush.msra.mxu0 0.0
    %193 = vmatpush.msra.mxu0 0.0
    %194 = vmatpush.msra.mxu0 0.0
    %195 = vmatpush.msra.mxu0 0.0
    %196 = vmatpush.msra.mxu0 0.0
    %197 = vmatpush.msra.mxu0 0.0
    %198 = vmatpush.msra.mxu0 0.0
    %199 = vmatpush.msra.mxu0 %v182
    %200 = vmatpush.msra.mxu0 %v181
    %201 = vmatpush.msra.mxu0 %v180
    %202 = vmatpush.msra.mxu0 %v179
    %203 = vmatpush.msra.mxu0 %v178
    %204 = vmatpush.msra.mxu0 %v177
    %205 = vmatpush.msra.mxu0 %v176
    %206 = vmatpush.msra.mxu0 %v175
    %207 = vmatmul.f32.gmra.mxu0 %v189
    %v208 = vpop.f32.mrf.mxu0
    %v209 = vadd.f32 %v185, %v208
    %210 = vdwg.mxu0
    %211 = vmatpush.msra.mxu0 %v140
    %212 = vmatpush.msra.mxu0 %v139
    %213 = vmatpush.msra.mxu0 %v138
    %214 = vmatpush.msra.mxu0 %v137
    %215 = vmatpush.msra.mxu0 %v136
    %216 = vmatpush.msra.mxu0 %v135
    %217 = vmatpush.msra.mxu0 %v134
    %218 = vmatpush.msra.mxu0 %v133
    %219 = vmatpush.msra.mxu0 %v132
    %220 = vmatpush.msra.mxu0 %v131
    %221 = vmatpush.msra.mxu0 %v130
    %222 = vmatpush.msra.mxu0 %v129
    %223 = vmatpush.msra.mxu0 %v128
    %224 = vmatpush.msra.mxu0 %v127
    %225 = vmatpush.msra.mxu0 %v126
    %226 = vmatpush.msra.mxu0 %v125
    %227 = vmatmul.f32.gmra.mxu0 0.0
    %v228 = vpop.f32.mrf.mxu0
    %v229 = vadd.f32 0.0, %v228
    %230 = vdwg.mxu0
    %v231 = vadd.f32 %v209, %v229
    %v232 = vtanh.pop %v231
    %233 = vmatpush.msra.mxu0 %v140
    %234 = vmatpush.msra.mxu0 %v139
    %235 = vmatpush.msra.mxu0 %v138
    %236 = vmatpush.msra.mxu0 %v137
    %237 = vmatpush.msra.mxu0 %v136
    %238 = vmatpush.msra.mxu0 %v135
    %239 = vmatpush.msra.mxu0 %v134
    %240 = vmatpush.msra.mxu0 %v133
    %241 = vmatpush.msra.mxu0 %v132
    %242 = vmatpush.msra.mxu0 %v131
    %243 = vmatpush.msra.mxu0 %v130
    %244 = vmatpush.msra.mxu0 %v129
    %245 = vmatpush.msra.mxu0 %v128
    %246 = vmatpush.msra.mxu0 %v127
    %247 = vmatpush.msra.mxu0 %v126
    %248 = vmatpush.msra.mxu0 %v125
    %249 = vmatmul.f32.gmra.mxu0 %v232
    %v250 = vpop.f32.mrf.mxu0
    %v251 = vadd.f32 0.0, %v250
    %252 = vdwg.mxu0
    %v254 = vrot.slane %v251, 7
    %v256 = vadd.f32 %v209, %v254
    %v257 = vtanh.pop %v256
    %258 = vmatpush.msra.mxu0 %v156
    %259 = vmatpush.msra.mxu0 %v155
    %260 = vmatpush.msra.mxu0 %v154
    %261 = vmatpush.msra.mxu0 %v153
    %262 = vmatpush.msra.mxu0 %v152
    %263 = vmatpush.msra.mxu0 %v151
    %264 = vmatpush.msra.mxu0 %v150
    %265 = vmatpush.msra.mxu0 %v149
    %266 = vmatpush.msra.mxu0 %v148
    %267 = vmatpush.msra.mxu0 %v147
    %268 = vmatpush.msra.mxu0 %v146
    %269 = vmatpush.msra.mxu0 %v145
    %270 = vmatpush.msra.mxu0 %v144
    %271 = vmatpush.msra.mxu0 %v143
    %272 = vmatpush.msra.mxu0 %v142
    %273 = vmatpush.msra.mxu0 %v141
    %274 = vmatmul.f32.gmra.mxu0 %v232
    %v275 = vpop.f32.mrf.mxu0
    %v276 = vadd.f32 %v173, %v275
    %277 = vdwg.mxu0
    %278 = vmatpush.msra.mxu0 %v172
    %279 = vmatpush.msra.mxu0 %v171
    %280 = vmatpush.msra.mxu0 %v170
    %281 = vmatpush.msra.mxu0 %v169
    %282 = vmatpush.msra.mxu0 %v168
    %283 = vmatpush.msra.mxu0 %v167
    %284 = vmatpush.msra.mxu0 %v166
    %285 = vmatpush.msra.mxu0 %v165
    %286 = vmatpush.msra.mxu0 %v164
    %287 = vmatpush.msra.mxu0 %v163
    %288 = vmatpush.msra.mxu0 %v162
    %289 = vmatpush.msra.mxu0 %v161
    %290 = vmatpush.msra.mxu0 %v160
    %291 = vmatpush.msra.mxu0 %v159
    %292 = vmatpush.msra.mxu0 %v158
    %293 = vmatpush.msra.mxu0 %v157
    %294 = vmatmul.f32.gmra.mxu0 0.0
    %v295 = vpop.f32.mrf.mxu0
    %v296 = vadd.f32 0.0, %v295
    %297 = vdwg.mxu0
    %v298 = vadd.f32 %v276, %v296
    %v299 = vtanh.pop %v298
    %v301 = vrot.slane %v257, 1
    %303 = vmatpush.msra.mxu0 %v140
    %304 = vmatpush.msra.mxu0 %v139
    %305 = vmatpush.msra.mxu0 %v138
    %306 = vmatpush.msra.mxu0 %v137
    %307 = vmatpush.msra.mxu0 %v136
    %308 = vmatpush.msra.mxu0 %v135
    %309 = vmatpush.msra.mxu0 %v134
    %310 = vmatpush.msra.mxu0 %v133
    %311 = vmatpush.msra.mxu0 %v132
    %312 = vmatpush.msra.mxu0 %v131
    %313 = vmatpush.msra.mxu0 %v130
    %314 = vmatpush.msra.mxu0 %v129
    %315 = vmatpush.msra.mxu0 %v128
    %316 = vmatpush.msra.mxu0 %v127
    %317 = vmatpush.msra.mxu0 %v126
    %318 = vmatpush.msra.mxu0 %v125
    %319 = vmatmul.f32.gmra.mxu0 %v301
    %v320 = vpop.f32.mrf.mxu0
    %v321 = vadd.f32 0.0, %v320
    %322 = vdwg.mxu0
    %v324 = vrot.slane %v321, 6
    %v326 = vadd.f32 %v209, %v324
    %v327 = vtanh.pop %v326
    %328 = vmatpush.msra.mxu0 %v156
    %329 = vmatpush.msra.mxu0 %v155
    %330 = vmatpush.msra.mxu0 %v154
    %331 = vmatpush.msra.mxu0 %v153
    %332 = vmatpush.msra.mxu0 %v152
    %333 = vmatpush.msra.mxu0 %v151
    %334 = vmatpush.msra.mxu0 %v150
    %335 = vmatpush.msra.mxu0 %v149
    %336 = vmatpush.msra.mxu0 %v148
    %337 = vmatpush.msra.mxu0 %v147
    %338 = vmatpush.msra.mxu0 %v146
    %339 = vmatpush.msra.mxu0 %v145
    %340 = vmatpush.msra.mxu0 %v144
    %341 = vmatpush.msra.mxu0 %v143
    %342 = vmatpush.msra.mxu0 %v142
    %343 = vmatpush.msra.mxu0 %v141
    %344 = vmatmul.f32.gmra.mxu0 %v301
    %v345 = vpop.f32.mrf.mxu0
    %v346 = vadd.f32 %v173, %v345
    %347 = vdwg.mxu0
    %348 = vmatpush.msra.mxu0 %v172
    %349 = vmatpush.msra.mxu0 %v171
    %350 = vmatpush.msra.mxu0 %v170
    %351 = vmatpush.msra.mxu0 %v169
    %352 = vmatpush.msra.mxu0 %v168
    %353 = vmatpush.msra.mxu0 %v167
    %354 = vmatpush.msra.mxu0 %v166
    %355 = vmatpush.msra.mxu0 %v165
    %356 = vmatpush.msra.mxu0 %v164
    %357 = vmatpush.msra.mxu0 %v163
    %358 = vmatpush.msra.mxu0 %v162
    %359 = vmatpush.msra.mxu0 %v161
    %360 = vmatpush.msra.mxu0 %v160
    %361 = vmatpush.msra.mxu0 %v159
    %362 = vmatpush.msra.mxu0 %v158
    %363 = vmatpush.msra.mxu0 %v157
    %364 = vmatmul.f32.gmra.mxu0 %v299
    %v365 = vpop.f32.mrf.mxu0
    %v366 = vadd.f32 0.0, %v365
    %367 = vdwg.mxu0
    %v368 = vadd.f32 %v346, %v366
    %v369 = vtanh.pop %v368
    %v371 = vrot.slane %v327, 2
    %373 = vmatpush.msra.mxu0 %v140
    %374 = vmatpush.msra.mxu0 %v139
    %375 = vmatpush.msra.mxu0 %v138
    %376 = vmatpush.msra.mxu0 %v137
    %377 = vmatpush.msra.mxu0 %v136
    %378 = vmatpush.msra.mxu0 %v135
    %379 = vmatpush.msra.mxu0 %v134
    %380 = vmatpush.msra.mxu0 %v133
    %381 = vmatpush.msra.mxu0 %v132
    %382 = vmatpush.msra.mxu0 %v131
    %383 = vmatpush.msra.mxu0 %v130
    %384 = vmatpush.msra.mxu0 %v129
    %385 = vmatpush.msra.mxu0 %v128
    %386 = vmatpush.msra.mxu0 %v127
    %387 = vmatpush.msra.mxu0 %v126
    %388 = vmatpush.msra.mxu0 %v125
    %389 = vmatmul.f32.gmra.mxu0 %v371
    %v390 = vpop.f32.mrf.mxu0
    %v391 = vadd.f32 0.0, %v390
    %392 = vdwg.mxu0
    %v394 = vrot.slane %v391, 5
    %v396 = vadd.f32 %v209, %v394
    %v397 = vtanh.pop %v396
    %398 = vmatpush.msra.mxu0 %v156
    %399 = vmatpush.msra.mxu0 %v155
    %400 = vmatpush.msra.mxu0 %v154
    %401 = vmatpush.msra.mxu0 %v153
    %402 = vmatpush.msra.mxu0 %v152
    %403 = vmatpush.msra.mxu0 %v151
    %404 = vmatpush.msra.mxu0 %v150
    %405 = vmatpush.msra.mxu0 %v149
    %406 = vmatpush.msra.mxu0 %v148
    %407 = vmatpush.msra.mxu0 %v147
    %408 = vmatpush.msra.mxu0 %v146
    %409 = vmatpush.msra.mxu0 %v145
    %410 = vmatpush.msra.mxu0 %v144
    %411 = vmatpush.msra.mxu0 %v143
    %412 = vmatpush.msra.mxu0 %v142
    %413 = vmatpush.msra.mxu0 %v141
    %414 = vmatmul.f32.gmra.mxu0 %v371
    %v415 = vpop.f32.mrf.mxu0
    %v416 = vadd.f32 %v173, %v415
    %417 = vdwg.mxu0
    %418 = vmatpush.msra.mxu0 %v172
    %419 = vmatpush.msra.mxu0 %v171
    %420 = vmatpush.msra.mxu0 %v170
    %421 = vmatpush.msra.mxu0 %v169
    %422 = vmatpush.msra.mxu0 %v168
    %423 = vmatpush.msra.mxu0 %v167
    %424 = vmatpush.msra.mxu0 %v166
    %425 = vmatpush.msra.mxu0 %v165
    %426 = vmatpush.msra.mxu0 %v164
    %427 = vmatpush.msra.mxu0 %v163
    %428 = vmatpush.msra.mxu0 %v162
    %429 = vmatpush.msra.mxu0 %v161
    %430 = vmatpush.msra.mxu0 %v160
    %431 = vmatpush.msra.mxu0 %v159
    %432 = vmatpush.msra.mxu0 %v158
    %433 = vmatpush.msra.mxu0 %v157
    %434 = vmatmul.f32.gmra.mxu0 %v369
    %v435 = vpop.f32.mrf.mxu0
    %v436 = vadd.f32 0.0, %v435
    %437 = vdwg.mxu0
    %v438 = vadd.f32 %v416, %v436
    %v439 = vtanh.pop %v438
    %v441 = vrot.slane %v397, 3
    %443 = vmatpush.msra.mxu0 %v140
    %444 = vmatpush.msra.mxu0 %v139
    %445 = vmatpush.msra.mxu0 %v138
    %446 = vmatpush.msra.mxu0 %v137
    %447 = vmatpush.msra.mxu0 %v136
    %448 = vmatpush.msra.mxu0 %v135
    %449 = vmatpush.msra.mxu0 %v134
    %450 = vmatpush.msra.mxu0 %v133
    %451 = vmatpush.msra.mxu0 %v132
    %452 = vmatpush.msra.mxu0 %v131
    %453 = vmatpush.msra.mxu0 %v130
    %454 = vmatpush.msra.mxu0 %v129
    %455 = vmatpush.msra.mxu0 %v128
    %456 = vmatpush.msra.mxu0 %v127
    %457 = vmatpush.msra.mxu0 %v126
    %458 = vmatpush.msra.mxu0 %v125
    %459 = vmatmul.f32.gmra.mxu0 %v441
    %v460 = vpop.f32.mrf.mxu0
    %v461 = vadd.f32 0.0, %v460
    %462 = vdwg.mxu0
    %v464 = vrot.slane %v461, 4
    %v466 = vadd.f32 %v209, %v464
    %v467 = vtanh.pop %v466
    %468 = vmatpush.msra.mxu0 %v156
    %469 = vmatpush.msra.mxu0 %v155
    %470 = vmatpush.msra.mxu0 %v154
    %471 = vmatpush.msra.mxu0 %v153
    %472 = vmatpush.msra.mxu0 %v152
    %473 = vmatpush.msra.mxu0 %v151
    %474 = vmatpush.msra.mxu0 %v150
    %475 = vmatpush.msra.mxu0 %v149
    %476 = vmatpush.msra.mxu0 %v148
    %477 = vmatpush.msra.mxu0 %v147
    %478 = vmatpush.msra.mxu0 %v146
    %479 = vmatpush.msra.mxu0 %v145
    %480 = vmatpush.msra.mxu0 %v144
    %481 = vmatpush.msra.mxu0 %v143
    %482 = vmatpush.msra.mxu0 %v142
    %483 = vmatpush.msra.mxu0 %v141
    %484 = vmatmul.f32.gmra.mxu0 %v441
    %v485 = vpop.f32.mrf.mxu0
    %v486 = vadd.f32 %v173, %v485
    %487 = vdwg.mxu0
    %488 = vmatpush.msra.mxu0 %v172
    %489 = vmatpush.msra.mxu0 %v171
    %490 = vmatpush.msra.mxu0 %v170
    %491 = vmatpush.msra.mxu0 %v169
    %492 = vmatpush.msra.mxu0 %v168
    %493 = vmatpush.msra.mxu0 %v167
    %494 = vmatpush.msra.mxu0 %v166
    %495 = vmatpush.msra.mxu0 %v165
    %496 = vmatpush.msra.mxu0 %v164
    %497 = vmatpush.msra.mxu0 %v163
    %498 = vmatpush.msra.mxu0 %v162
    %499 = vmatpush.msra.mxu0 %v161
    %500 = vmatpush.msra.mxu0 %v160
    %501 = vmatpush.msra.mxu0 %v159
    %502 = vmatpush.msra.mxu0 %v158
    %503 = vmatpush.msra.mxu0 %v157
    %504 = vmatmul.f32.gmra.mxu0 %v439
    %v505 = vpop.f32.mrf.mxu0
    %v506 = vadd.f32 0.0, %v505
    %507 = vdwg.mxu0
    %v508 = vadd.f32 %v486, %v506
    %v509 = vtanh.pop %v508
    %v511 = vrot.slane %v467, 4
    %513 = vmatpush.msra.mxu0 %v140
    %514 = vmatpush.msra.mxu0 %v139
    %515 = vmatpush.msra.mxu0 %v138
    %516 = vmatpush.msra.mxu0 %v137
    %517 = vmatpush.msra.mxu0 %v136
    %518 = vmatpush.msra.mxu0 %v135
    %519 = vmatpush.msra.mxu0 %v134
    %520 = vmatpush.msra.mxu0 %v133
    %521 = vmatpush.msra.mxu0 %v132
    %522 = vmatpush.msra.mxu0 %v131
    %523 = vmatpush.msra.mxu0 %v130
    %524 = vmatpush.msra.mxu0 %v129
    %525 = vmatpush.msra.mxu0 %v128
    %526 = vmatpush.msra.mxu0 %v127
    %527 = vmatpush.msra.mxu0 %v126
    %528 = vmatpush.msra.mxu0 %v125
    %529 = vmatmul.f32.gmra.mxu0 %v511
    %v530 = vpop.f32.mrf.mxu0
    %v531 = vadd.f32 0.0, %v530
    %532 = vdwg.mxu0
    %v534 = vrot.slane %v531, 3
    %v536 = vadd.f32 %v209, %v534
    %v537 = vtanh.pop %v536
    %538 = vmatpush.msra.mxu0 %v156
    %539 = vmatpush.msra.mxu0 %v155
    %540 = vmatpush.msra.mxu0 %v154
    %541 = vmatpush.msra.mxu0 %v153
    %542 = vmatpush.msra.mxu0 %v152
    %543 = vmatpush.msra.mxu0 %v151
    %544 = vmatpush.msra.mxu0 %v150
    %545 = vmatpush.msra.mxu0 %v149
    %546 = vmatpush.msra.mxu0 %v148
    %547 = vmatpush.msra.mxu0 %v147
    %548 = vmatpush.msra.mxu0 %v146
    %549 = vmatpush.msra.mxu0 %v145
    %550 = vmatpush.msra.mxu0 %v144
    %551 = vmatpush.msra.mxu0 %v143
    %552 = vmatpush.msra.mxu0 %v142
    %553 = vmatpush.msra.mxu0 %v141
    %554 = vmatmul.f32.gmra.mxu0 %v511
    %v555 = vpop.f32.mrf.mxu0
    %v556 = vadd.f32 %v173, %v555
    %557 = vdwg.mxu0
    %558 = vmatpush.msra.mxu0 %v172
    %559 = vmatpush.msra.mxu0 %v171
    %560 = vmatpush.msra.mxu0 %v170
    %561 = vmatpush.msra.mxu0 %v169
    %562 = vmatpush.msra.mxu0 %v168
    %563 = vmatpush.msra.mxu0 %v167
    %564 = vmatpush.msra.mxu0 %v166
    %565 = vmatpush.msra.mxu0 %v165
    %566 = vmatpush.msra.mxu0 %v164
    %567 = vmatpush.msra.mxu0 %v163
    %568 = vmatpush.msra.mxu0 %v162
    %569 = vmatpush.msra.mxu0 %v161
    %570 = vmatpush.msra.mxu0 %v160
    %571 = vmatpush.msra.mxu0 %v159
    %572 = vmatpush.msra.mxu0 %v158
    %573 = vmatpush.msra.mxu0 %v157
    %574 = vmatmul.f32.gmra.mxu0 %v509
    %v575 = vpop.f32.mrf.mxu0
    %v576 = vadd.f32 0.0, %v575
    %577 = vdwg.mxu0
    %v578 = vadd.f32 %v556, %v576
    %v579 = vtanh.pop %v578
    %v581 = vrot.slane %v537, 5
    %583 = vmatpush.msra.mxu0 %v140
    %584 = vmatpush.msra.mxu0 %v139
    %585 = vmatpush.msra.mxu0 %v138
    %586 = vmatpush.msra.mxu0 %v137
    %587 = vmatpush.msra.mxu0 %v136
    %588 = vmatpush.msra.mxu0 %v135
    %589 = vmatpush.msra.mxu0 %v134
    %590 = vmatpush.msra.mxu0 %v133
    %591 = vmatpush.msra.mxu0 %v132
    %592 = vmatpush.msra.mxu0 %v131
    %593 = vmatpush.msra.mxu0 %v130
    %594 = vmatpush.msra.mxu0 %v129
    %595 = vmatpush.msra.mxu0 %v128
    %596 = vmatpush.msra.mxu0 %v127
    %597 = vmatpush.msra.mxu0 %v126
    %598 = vmatpush.msra.mxu0 %v125
    %599 = vmatmul.f32.gmra.mxu0 %v581
    %v600 = vpop.f32.mrf.mxu0
    %v601 = vadd.f32 0.0, %v600
    %602 = vdwg.mxu0
    %v604 = vrot.slane %v601, 2
    %v606 = vadd.f32 %v209, %v604
    %v607 = vtanh.pop %v606
    %608 = vmatpush.msra.mxu0 %v156
    %609 = vmatpush.msra.mxu0 %v155
    %610 = vmatpush.msra.mxu0 %v154
    %611 = vmatpush.msra.mxu0 %v153
    %612 = vmatpush.msra.mxu0 %v152
    %613 = vmatpush.msra.mxu0 %v151
    %614 = vmatpush.msra.mxu0 %v150
    %615 = vmatpush.msra.mxu0 %v149
    %616 = vmatpush.msra.mxu0 %v148
    %617 = vmatpush.msra.mxu0 %v147
    %618 = vmatpush.msra.mxu0 %v146
    %619 = vmatpush.msra.mxu0 %v145
    %620 = vmatpush.msra.mxu0 %v144
    %621 = vmatpush.msra.mxu0 %v143
    %622 = vmatpush.msra.mxu0 %v142
    %623 = vmatpush.msra.mxu0 %v141
    %624 = vmatmul.f32.gmra.mxu0 %v581
    %v625 = vpop.f32.mrf.mxu0
    %v626 = vadd.f32 %v173, %v625
    %627 = vdwg.mxu0
    %628 = vmatpush.msra.mxu0 %v172
    %629 = vmatpush.msra.mxu0 %v171
    %630 = vmatpush.msra.mxu0 %v170
    %631 = vmatpush.msra.mxu0 %v169
    %632 = vmatpush.msra.mxu0 %v168
    %633 = vmatpush.msra.mxu0 %v167
    %634 = vmatpush.msra.mxu0 %v166
    %635 = vmatpush.msra.mxu0 %v165
    %636 = vmatpush.msra.mxu0 %v164
    %637 = vmatpush.msra.mxu0 %v163
    %638 = vmatpush.msra.mxu0 %v162
    %639 = vmatpush.msra.mxu0 %v161
    %640 = vmatpush.msra.mxu0 %v160
    %641 = vmatpush.msra.mxu0 %v159
    %642 = vmatpush.msra.mxu0 %v158
    %643 = vmatpush.msra.mxu0 %v157
    %644 = vmatmul.f32.gmra.mxu0 %v579
    %v645 = vpop.f32.mrf.mxu0
    %v646 = vadd.f32 0.0, %v645
    %647 = vdwg.mxu0
    %v648 = vadd.f32 %v626, %v646
    %v649 = vtanh.pop %v648
    %v651 = vrot.slane %v607, 6
    %653 = vmatpush.msra.mxu0 %v140
    %654 = vmatpush.msra.mxu0 %v139
    %655 = vmatpush.msra.mxu0 %v138
    %656 = vmatpush.msra.mxu0 %v137
    %657 = vmatpush.msra.mxu0 %v136
    %658 = vmatpush.msra.mxu0 %v135
    %659 = vmatpush.msra.mxu0 %v134
    %660 = vmatpush.msra.mxu0 %v133
    %661 = vmatpush.msra.mxu0 %v132
    %662 = vmatpush.msra.mxu0 %v131
    %663 = vmatpush.msra.mxu0 %v130
    %664 = vmatpush.msra.mxu0 %v129
    %665 = vmatpush.msra.mxu0 %v128
    %666 = vmatpush.msra.mxu0 %v127
    %667 = vmatpush.msra.mxu0 %v126
    %668 = vmatpush.msra.mxu0 %v125
    %669 = vmatmul.f32.gmra.mxu0 %v651
    %v670 = vpop.f32.mrf.mxu0
    %v671 = vadd.f32 0.0, %v670
    %672 = vdwg.mxu0
    %v674 = vrot.slane %v671, 1
    %v676 = vadd.f32 %v209, %v674
    %v677 = vtanh.pop %v676
    %678 = vmatpush.msra.mxu0 %v156
    %679 = vmatpush.msra.mxu0 %v155
    %680 = vmatpush.msra.mxu0 %v154
    %681 = vmatpush.msra.mxu0 %v153
    %682 = vmatpush.msra.mxu0 %v152
    %683 = vmatpush.msra.mxu0 %v151
    %684 = vmatpush.msra.mxu0 %v150
    %685 = vmatpush.msra.mxu0 %v149
    %686 = vmatpush.msra.mxu0 %v148
    %687 = vmatpush.msra.mxu0 %v147
    %688 = vmatpush.msra.mxu0 %v146
    %689 = vmatpush.msra.mxu0 %v145
    %690 = vmatpush.msra.mxu0 %v144
    %691 = vmatpush.msra.mxu0 %v143
    %692 = vmatpush.msra.mxu0 %v142
    %693 = vmatpush.msra.mxu0 %v141
    %694 = vmatmul.f32.gmra.mxu0 %v651
    %v695 = vpop.f32.mrf.mxu0
    %v696 = vadd.f32 %v173, %v695
    %697 = vdwg.mxu0
    %698 = vmatpush.msra.mxu0 %v172
    %699 = vmatpush.msra.mxu0 %v171
    %700 = vmatpush.msra.mxu0 %v170
    %701 = vmatpush.msra.mxu0 %v169
    %702 = vmatpush.msra.mxu0 %v168
    %703 = vmatpush.msra.mxu0 %v167
    %704 = vmatpush.msra.mxu0 %v166
    %705 = vmatpush.msra.mxu0 %v165
    %706 = vmatpush.msra.mxu0 %v164
    %707 = vmatpush.msra.mxu0 %v163
    %708 = vmatpush.msra.mxu0 %v162
    %709 = vmatpush.msra.mxu0 %v161
    %710 = vmatpush.msra.mxu0 %v160
    %711 = vmatpush.msra.mxu0 %v159
    %712 = vmatpush.msra.mxu0 %v158
    %713 = vmatpush.msra.mxu0 %v157
    %714 = vmatmul.f32.gmra.mxu0 %v649
    %v715 = vpop.f32.mrf.mxu0
    %v716 = vadd.f32 0.0, %v715
    %717 = vdwg.mxu0
    %v718 = vadd.f32 %v696, %v716
    %v719 = vtanh.pop %v718
    %v721 = vrot.slane %v677, 7
    %723 = vmatpush.msra.mxu0 %v156
    %724 = vmatpush.msra.mxu0 %v155
    %725 = vmatpush.msra.mxu0 %v154
    %726 = vmatpush.msra.mxu0 %v153
    %727 = vmatpush.msra.mxu0 %v152
    %728 = vmatpush.msra.mxu0 %v151
    %729 = vmatpush.msra.mxu0 %v150
    %730 = vmatpush.msra.mxu0 %v149
    %731 = vmatpush.msra.mxu0 %v148
    %732 = vmatpush.msra.mxu0 %v147
    %733 = vmatpush.msra.mxu0 %v146
    %734 = vmatpush.msra.mxu0 %v145
    %735 = vmatpush.msra.mxu0 %v144
    %736 = vmatpush.msra.mxu0 %v143
    %737 = vmatpush.msra.mxu0 %v142
    %738 = vmatpush.msra.mxu0 %v141
    %739 = vmatmul.f32.gmra.mxu0 %v721
    %v740 = vpop.f32.mrf.mxu0
    %v741 = vadd.f32 %v173, %v740
    %742 = vdwg.mxu0
    %743 = vmatpush.msra.mxu0 %v172
    %744 = vmatpush.msra.mxu0 %v171
    %745 = vmatpush.msra.mxu0 %v170
    %746 = vmatpush.msra.mxu0 %v169
    %747 = vmatpush.msra.mxu0 %v168
    %748 = vmatpush.msra.mxu0 %v167
    %749 = vmatpush.msra.mxu0 %v166
    %750 = vmatpush.msra.mxu0 %v165
    %751 = vmatpush.msra.mxu0 %v164
    %752 = vmatpush.msra.mxu0 %v163
    %753 = vmatpush.msra.mxu0 %v162
    %754 = vmatpush.msra.mxu0 %v161
    %755 = vmatpush.msra.mxu0 %v160
    %756 = vmatpush.msra.mxu0 %v159
    %757 = vmatpush.msra.mxu0 %v158
    %758 = vmatpush.msra.mxu0 %v157
    %759 = vmatmul.f32.gmra.mxu0 %v719
    %v760 = vpop.f32.mrf.mxu0
    %v761 = vadd.f32 0.0, %v760
    %762 = vdwg.mxu0
    %v763 = vadd.f32 %v741, %v761
    %v764 = vtanh.pop %v763
    %v766 = vrot.slane %v369, 7
    %v769 = vrot.slane %v439, 6
    %v772 = vrot.slane %v509, 5
    %v775 = vrot.slane %v579, 4
    %v778 = vrot.slane %v649, 3
    %v781 = vrot.slane %v719, 2
    %v784 = vrot.slane %v764, 1
    %vm786 = vcmask 1040384
    %v787 = vsel %vm786, %v299, %v766
    %vm788 = vcmask 1041408
    %v789 = vsel %vm788, %v787, %v769
    %vm790 = vcmask 1042432
    %v791 = vsel %vm790, %v789, %v772
    %vm792 = vcmask 1043456
    %v793 = vsel %vm792, %v791, %v775
    %vm794 = vcmask 1044480
    %v795 = vsel %vm794, %v793, %v778
    %vm796 = vcmask 1045504
    %v797 = vsel %vm796, %v795, %v781
    %vm798 = vcmask 1046528
    %v799 = vsel %vm798, %v797, %v784
    %v800 = vld [vmem:[#allocation11] sm:$0xff]
    %v801 = vld [vmem:[#allocation11 + $0x8] sm:$0xff]
    %v802 = vld [vmem:[#allocation11 + $0x10] sm:$0xff]
    %v803 = vld [vmem:[#allocation11 + $0x18] sm:$0xff]
    %v804 = vld [vmem:[#allocation11 + $0x20] sm:$0xff]
    %v805 = vld [vmem:[#allocation11 + $0x28] sm:$0xff]
    %v806 = vld [vmem:[#allocation11 + $0x30] sm:$0xff]
    %v807 = vld [vmem:[#allocation11 + $0x38] sm:$0xff]
    %v808 = vld [vmem:[#allocation11 + $0x40] sm:$0xff]
    %v809 = vld [vmem:[#allocation11 + $0x48] sm:$0xff]
    %v810 = vld [vmem:[#allocation11 + $0x50] sm:$0xff]
    %v811 = vld [vmem:[#allocation11 + $0x58] sm:$0xff]
    %v812 = vld [vmem:[#allocation11 + $0x60] sm:$0xff]
    %v813 = vld [vmem:[#allocation11 + $0x68] sm:$0xff]
    %v814 = vld [vmem:[#allocation11 + $0x70] sm:$0xff]
    %v815 = vld [vmem:[#allocation11 + $0x78] sm:$0xff]
    %v816 = vld [vmem:[%s8] sm:$0x1]
    %v818 = vperm.slane %v816, 0
    %820 = vmatpush.msra.mxu0 %v815
    %821 = vmatpush.msra.mxu0 %v814
    %822 = vmatpush.msra.mxu0 %v813
    %823 = vmatpush.msra.mxu0 %v812
    %824 = vmatpush.msra.mxu0 %v811
    %825 = vmatpush.msra.mxu0 %v810
    %826 = vmatpush.msra.mxu0 %v809
    %827 = vmatpush.msra.mxu0 %v808
    %828 = vmatpush.msra.mxu0 %v807
    %829 = vmatpush.msra.mxu0 %v806
    %830 = vmatpush.msra.mxu0 %v805
    %831 = vmatpush.msra.mxu0 %v804
    %832 = vmatpush.msra.mxu0 %v803
    %833 = vmatpush.msra.mxu0 %v802
    %834 = vmatpush.msra.mxu0 %v801
    %835 = vmatpush.msra.mxu0 %v800
    %836 = vmatmul.f32.gmra.mxu0 %v799
    %v837 = vpop.f32.mrf.mxu0
    %v838 = vadd.f32 %v818, %v837
    %839 = vdwg.mxu0
    %840 = vst [vmem:[#allocation13] sm:$0xff] %v838
    // Predicated region
    $region62: #{tpu_custom_call.1} parent=1 // pred_check
      _
    $region63: #{tpu_custom_call.1} parent=1 // pred_check_branch
      %842 = sbr.rel (0) target = $region65
    $region64: #{tpu_custom_call.1} parent=1 // pred_region
      %844 = vsyncadd [#allocation4], 0
      %s846 = sshll.u32 [#allocation13], 4
      %s847 = int_to_ptr.vmem [resolvable:$true] %s846
      %s848 = sshll.u32 %s9, 4
      %s849 = int_to_ptr.hbm [resolvable:$true] %s848
      %851 = dma.vmem_to_hbm [thread:$0]  %s847, 128, %s849, [#allocation4]
    $region65: #{tpu_custom_call.1} parent=1 // pred_fallthru
      _
    // Predicated region
    $region66: #{tpu_custom_call.1} parent=1 // pred_check
      _
    $region67: #{tpu_custom_call.1} parent=1 // pred_check_branch
      %853 = sbr.rel (0) target = $region69
    $region68: #{tpu_custom_call.1} parent=1 // pred_region
      %855 = dma.done [#allocation4], 128
    $region69: #{tpu_custom_call.1} parent=1 // pred_fallthru
      _
    %856 = vsyncpa [#allocation3], 1
    %857 = vsyncpa [#allocation6], 1
    %858 = vsyncpa [#allocation9], 1
    %859 = vsyncpa [#allocation12], 1
    %860 = vsyncpa [#allocation4], 1

</llo_original>
